<compile_context>
chip_gen: v7x
topology: tpu7x:2x2x1
jax: 0.10.0
libtpu: 0.0.40
codegen_flags: <defaults>
</compile_context>

<pallas_src>
import functools

import jax
import jax.numpy as jnp
from jax.experimental import pallas as pl
from jax.experimental.pallas import tpu as pltpu

LANE = 128          # TPU lane width (last dim)
SUBLANE_BF16 = 16   # bf16 sublane packing (second-to-last dim)


def _round_up(x, m):
    return (x + m - 1) // m * m


def _pad_dim(d):
    # 128-lane minimum; 256-align larger dims so v6e/v7x's 256-wide MXU columns
    # are fully used.  v5e (4x128^2) is already saturated at 128.
    return 128 if d <= 128 else _round_up(d, 256)


# ---------------------------------------------------------------------------
# Kernels
# ---------------------------------------------------------------------------
def _mlp_body(x_bf16, w1, b1, w2, b2, w3, b3):
    """relu(fc1) -> relu(fc2) -> relu(fc2) -> relu(fc3), matching torch forward.

    Matmuls run bf16 on the MXU with f32 accumulation; bias add / ReLU stay f32
    (portable to v5e, where the VPU has no bf16 path).
    """
    h = jnp.dot(x_bf16, w1, preferred_element_type=jnp.float32) + b1
    h = jnp.maximum(h, 0.0)
    h = jnp.dot(h.astype(jnp.bfloat16), w2, preferred_element_type=jnp.float32) + b2
    h = jnp.maximum(h, 0.0)
    # fc2 applied a second time, exactly as in the PyTorch reference.
    h = jnp.dot(h.astype(jnp.bfloat16), w2, preferred_element_type=jnp.float32) + b2
    h = jnp.maximum(h, 0.0)
    h = jnp.dot(h.astype(jnp.bfloat16), w3, preferred_element_type=jnp.float32) + b3
    h = jnp.maximum(h, 0.0)
    return h


def _actor_mlp_kernel(x_ref, w1_ref, b1_ref, w2_ref, b2_ref, w3_ref, b3_ref, o_ref):
    o_ref[...] = _mlp_body(x_ref[...], w1_ref[...], b1_ref[...],
                           w2_ref[...], b2_ref[...], w3_ref[...], b3_ref[...])


def _actor_sample_kernel(x_ref, noise_ref, w1_ref, b1_ref, w2_ref, b2_ref,
                         w3_ref, b3_ref, o_ref, *, std):
    mean = _mlp_body(x_ref[...], w1_ref[...], b1_ref[...],
                     w2_ref[...], b2_ref[...], w3_ref[...], b3_ref[...])
    # Normal(mean, std).sample() epilogue fused into the kernel; `noise` is a
    # standard-normal slab drawn in the wrapper (portable, grid-invariant).
    o_ref[...] = mean + jnp.float32(std) * noise_ref[...]


# ---------------------------------------------------------------------------
# Parameter preparation
# ---------------------------------------------------------------------------
def prepare_params(params):
    """Pad feature dims to MXU-friendly widths; weights -> bf16, biases -> f32 (1, F)."""
    in_size, hidden = params["w1"].shape
    action = params["w3"].shape[1]
    in_p, hid_p, act_p = _pad_dim(in_size), _pad_dim(hidden), _pad_dim(action)

    def pad_w(w, rows, cols):
        return jnp.zeros((rows, cols), jnp.bfloat16).at[: w.shape[0], : w.shape[1]].set(
            w.astype(jnp.bfloat16))

    def pad_b(b, cols):
        return jnp.zeros((1, cols), jnp.float32).at[0, : b.shape[0]].set(
            b.astype(jnp.float32))

    return {
        "w1": pad_w(params["w1"], in_p, hid_p), "b1": pad_b(params["b1"], hid_p),
        "w2": pad_w(params["w2"], hid_p, hid_p), "b2": pad_b(params["b2"], hid_p),
        "w3": pad_w(params["w3"], hid_p, act_p), "b3": pad_b(params["b3"], act_p),
        "sizes": (in_size, hidden, action),   # python ints (stay static under jit)
    }


# ---------------------------------------------------------------------------
# Grid / spec setup
# ---------------------------------------------------------------------------
def _grid_setup(prep, x, extra_out_bytes=0):
    in_size, _, _ = prep["sizes"]
    in_p = prep["w1"].shape[0]
    hid_p = prep["w2"].shape[0]
    act_p = prep["w3"].shape[1]

    b = x.shape[0]
    # Tile sizing: small B -> one tile (grid=1, minimal overhead); large B ->
    # 512/1024-row tiles (per-step ~0.35us overhead amortized, >=2 grid steps
    # so v7x megacore sharding via "parallel" has work on both TensorCores).
    if b <= 512:
        tb = _round_up(b, SUBLANE_BF16)
    elif b <= 2048:
        tb = 512
    else:
        tb = 1024
    b_pad = _round_up(b, tb)

    # bf16 cast fused with the (only-if-needed) padding op: halves x DMA bytes.
    x_bf16 = x.astype(jnp.bfloat16)
    if (b, x.shape[1]) != (b_pad, in_p):
        x_bf16 = jnp.zeros((b_pad, in_p), jnp.bfloat16).at[:b, :in_size].set(x_bf16)

    grid = (b_pad // tb,)
    tiled = lambda i: (i, 0)      # batch-tiled x / noise / out
    resident = lambda i: (0, 0)   # weights/biases stay resident across the grid
    x_spec = pl.BlockSpec((tb, in_p), tiled)
    noise_spec = pl.BlockSpec((tb, act_p), tiled)
    out_spec = pl.BlockSpec((tb, act_p), tiled)
    # NOTE: if hidden_size scales into the thousands, add
    # pipeline_mode=pl.Buffered(1) to these grid-invariant specs so v7x's
    # 64 MiB VMEM isn't double-buffering multi-MiB weights.
    weight_specs = [
        pl.BlockSpec((in_p, hid_p), resident),   # w1
        pl.BlockSpec((1, hid_p), resident),      # b1
        pl.BlockSpec((hid_p, hid_p), resident),  # w2
        pl.BlockSpec((1, hid_p), resident),      # b2
        pl.BlockSpec((hid_p, act_p), resident),  # w3
        pl.BlockSpec((1, act_p), resident),      # b3
    ]

    flops = 2 * b_pad * (in_p * hid_p + 2 * hid_p * hid_p + hid_p * act_p)
    bytes_accessed = (
        b_pad * in_p * 2 + b_pad * act_p * 4 + extra_out_bytes               # x (bf16), out (f32)
        + 2 * (prep["w1"].size + prep["w2"].size + prep["w3"].size)          # bf16 weights
        + 4 * (prep["b1"].size + prep["b2"].size + prep["b3"].size))         # f32 biases
    cost = pl.CostEstimate(flops=int(flops), transcendentals=0,
                           bytes_accessed=int(bytes_accessed))
    return x_bf16, b, b_pad, tb, act_p, grid, x_spec, noise_spec, weight_specs, out_spec, cost


# ---------------------------------------------------------------------------
# Public wrappers (jit-friendly: close over `prep` so sizes stay static)
# ---------------------------------------------------------------------------
def actor_forward(x, prep):
    """ContinuousActorNetwork.forward as a single batch-gridded Pallas kernel."""
    squeeze = (x.ndim == 1)
    if squeeze:
        x = x[None, :]
    (x_pad, b, b_pad, _tb, act_p, grid, x_spec, _noise_spec, w_specs, out_spec,
     cost) = _grid_setup(prep, x)
    action_size = prep["sizes"][2]
    out = pl.pallas_call(
        _actor_mlp_kernel,
        out_shape=jax.ShapeDtypeStruct((b_pad, act_p), jnp.float32),
        grid=grid,
        in_specs=[x_spec] + w_specs,
        out_specs=out_spec,
        compiler_params=pltpu.CompilerParams(dimension_semantics=("parallel",)),
        cost_estimate=cost,
    )(x_pad, prep["w1"], prep["b1"], prep["w2"], prep["b2"], prep["w3"], prep["b3"])
    out = out[:b, :action_size]
    return out[0] if squeeze else out


def select_action(x, prep, std, key):
    """forward + Normal(mean, std).sample(); sampling epilogue fused in-kernel."""
    if x.ndim == 1:
        x = x[None, :]
    action_size = prep["sizes"][2]
    (x_pad, b, b_pad, _tb, act_p, grid, x_spec, noise_spec, w_specs, out_spec,
     cost) = _grid_setup(prep, x, extra_out_bytes=0)
    # Standard-normal noise slab (wrapper-side; portable across TPU generations
    # and the interpret path, unlike the in-kernel hardware PRNG).
    noise = jax.random.normal(key, (b_pad, act_p), jnp.float32)
    kernel = functools.partial(_actor_sample_kernel, std=float(std))
    out = pl.pallas_call(
        kernel,
        out_shape=jax.ShapeDtypeStruct((b_pad, act_p), jnp.float32),
        grid=grid,
        in_specs=[x_spec, noise_spec] + w_specs,
        out_specs=out_spec,
        compiler_params=pltpu.CompilerParams(dimension_semantics=("parallel",)),
        cost_estimate=cost,
    )(x_pad, noise,
      prep["w1"], prep["b1"], prep["w2"], prep["b2"], prep["w3"], prep["b3"])
    return out[:b, :action_size]


# ---------------------------------------------------------------------------
# Parameter init (PyTorch nn.Linear-like uniform fan-in; weights stored as W.T)
# ---------------------------------------------------------------------------
def init_params(key, input_size, hidden_size, action_size):
    ks = jax.random.split(key, 6)

    def uniform(k, shape, fan_in):
        bound = 1.0 / jnp.sqrt(jnp.float32(fan_in))
        return jax.random.uniform(k, shape, jnp.float32, -bound, bound)

    return {
        "w1": uniform(ks[0], (input_size, hidden_size), input_size),
        "b1": uniform(ks[1], (hidden_size,), input_size),
        "w2": uniform(ks[2], (hidden_size, hidden_size), hidden_size),
        "b2": uniform(ks[3], (hidden_size,), hidden_size),
        "w3": uniform(ks[4], (hidden_size, action_size), hidden_size),
        "b3": uniform(ks[5], (action_size,), hidden_size),
    }


if __name__ == "__main__":
    input_size, hidden_size, action_size = 16, 32, 4
    batch = 2
    std = 0.1

    key = jax.random.PRNGKey(0)
    k_param, k_x, k_noise = jax.random.split(key, 3)

    raw_params = init_params(k_param, input_size, hidden_size, action_size)
    prep = prepare_params(raw_params)
    x = jax.random.normal(k_x, (batch, input_size), dtype=jnp.float32)

    # jit the whole wrappers so per-call pad/cast/slice glue fuses with the
    # kernel launch (matters for the tiny-batch RL action-selection path).
    fwd = jax.jit(lambda xv: actor_forward(xv, prep))
    sel = jax.jit(lambda xv, k: select_action(xv, prep, std, k))

    # Forward pass (mean of the policy Gaussian).
    mean = fwd(x)
    jax.block_until_ready(mean)
    assert mean.shape == (batch, action_size)

    # Pure-JAX f32 reference of the torch forward (loose tol: kernel uses bf16 weights).
    def ref_forward(xr, p):
        h = jnp.maximum(xr @ p["w1"] + p["b1"], 0.0)
        h = jnp.maximum(h @ p["w2"] + p["b2"], 0.0)
        h = jnp.maximum(h @ p["w2"] + p["b2"], 0.0)
        h = jnp.maximum(h @ p["w3"] + p["b3"], 0.0)
        return h

    ref = ref_forward(x, raw_params)
    assert jnp.allclose(mean, ref, atol=5e-2, rtol=5e-2), (mean, ref)

    # Fused select_action: mean + std * N(0,1), sampled noise fused in-kernel.
    action = sel(x, k_noise)
    jax.block_until_ready(action)
    assert action.shape == (batch, action_size)
    assert bool(jnp.all(jnp.isfinite(action)))
    assert bool(jnp.all(jnp.abs(action - mean) < 6.0 * std + 1e-3))

    print("KERNEL_OK")
</pallas_src>

<mosaic_0001>
module attributes {stable_mosaic.version = 11 : i64} {
  func.func @_actor_mlp_kernel(%arg0: i32, %arg1: memref<16x128xbf16, #tpu.memory_space<vmem>>, %arg2: memref<128x128xbf16, #tpu.memory_space<vmem>>, %arg3: memref<1x128xf32, #tpu.memory_space<vmem>>, %arg4: memref<128x128xbf16, #tpu.memory_space<vmem>>, %arg5: memref<1x128xf32, #tpu.memory_space<vmem>>, %arg6: memref<128x128xbf16, #tpu.memory_space<vmem>>, %arg7: memref<1x128xf32, #tpu.memory_space<vmem>>, %arg8: memref<16x128xf32, #tpu.memory_space<vmem>>) attributes {dimension_semantics = [#tpu.dimension_semantics<parallel>], iteration_bounds = array<i64: 1>, scalar_prefetch = 0 : i64, scratch_operands = 0 : i64, tpu.core_type = #tpu.core_type<tc>, window_params = [{transform_indices = @transform_0, window_bounds = array<i64: 16, 128>}, {pipeline_mode = #tpu.pipeline_mode<synchronous>, transform_indices = @transform_1, window_bounds = array<i64: 128, 128>}, {pipeline_mode = #tpu.pipeline_mode<synchronous>, transform_indices = @transform_2, window_bounds = array<i64: 1, 128>}, {pipeline_mode = #tpu.pipeline_mode<synchronous>, transform_indices = @transform_3, window_bounds = array<i64: 128, 128>}, {pipeline_mode = #tpu.pipeline_mode<synchronous>, transform_indices = @transform_4, window_bounds = array<i64: 1, 128>}, {pipeline_mode = #tpu.pipeline_mode<synchronous>, transform_indices = @transform_5, window_bounds = array<i64: 128, 128>}, {pipeline_mode = #tpu.pipeline_mode<synchronous>, transform_indices = @transform_6, window_bounds = array<i64: 1, 128>}, {transform_indices = @transform_7, window_bounds = array<i64: 16, 128>}]} {
    %c0 = arith.constant 0 : index
    %c0_0 = arith.constant 0 : index
    %0 = vector.load %arg1[%c0, %c0_0] : memref<16x128xbf16, #tpu.memory_space<vmem>>, vector<16x128xbf16>
    %c0_1 = arith.constant 0 : index
    %c0_2 = arith.constant 0 : index
    %1 = vector.load %arg2[%c0_1, %c0_2] : memref<128x128xbf16, #tpu.memory_space<vmem>>, vector<128x128xbf16>
    %c0_3 = arith.constant 0 : index
    %c0_4 = arith.constant 0 : index
    %2 = vector.load %arg3[%c0_3, %c0_4] : memref<1x128xf32, #tpu.memory_space<vmem>>, vector<1x128xf32>
    %c0_5 = arith.constant 0 : index
    %c0_6 = arith.constant 0 : index
    %3 = vector.load %arg4[%c0_5, %c0_6] : memref<128x128xbf16, #tpu.memory_space<vmem>>, vector<128x128xbf16>
    %c0_7 = arith.constant 0 : index
    %c0_8 = arith.constant 0 : index
    %4 = vector.load %arg5[%c0_7, %c0_8] : memref<1x128xf32, #tpu.memory_space<vmem>>, vector<1x128xf32>
    %c0_9 = arith.constant 0 : index
    %c0_10 = arith.constant 0 : index
    %5 = vector.load %arg6[%c0_9, %c0_10] : memref<128x128xbf16, #tpu.memory_space<vmem>>, vector<128x128xbf16>
    %c0_11 = arith.constant 0 : index
    %c0_12 = arith.constant 0 : index
    %6 = vector.load %arg7[%c0_11, %c0_12] : memref<1x128xf32, #tpu.memory_space<vmem>>, vector<1x128xf32>
    %cst = arith.constant dense<0.000000e+00> : vector<16x128xf32>
    %7 = tpu.matmul %0, %1, %cst {dimension_numbers = #tpu.dot_dimension_numbers<[1], [0], [0], [1], [0, 0, 1, 1], [], []>} : vector<16x128xbf16>, vector<128x128xbf16>, vector<16x128xf32> -> vector<16x128xf32>
    %8 = vector.broadcast %2 : vector<1x128xf32> to vector<16x128xf32>
    %9 = arith.addf %7, %8 : vector<16x128xf32>
    %cst_13 = arith.constant 0.000000e+00 : f32
    %10 = vector.broadcast %cst_13 : f32 to vector<16x128xf32>
    %11 = arith.maximumf %9, %10 : vector<16x128xf32>
    %12 = arith.truncf %11 : vector<16x128xf32> to vector<16x128xbf16>
    %cst_14 = arith.constant dense<0.000000e+00> : vector<16x128xf32>
    %13 = tpu.matmul %12, %3, %cst_14 {dimension_numbers = #tpu.dot_dimension_numbers<[1], [0], [0], [1], [0, 0, 1, 1], [], []>} : vector<16x128xbf16>, vector<128x128xbf16>, vector<16x128xf32> -> vector<16x128xf32>
    %14 = vector.broadcast %4 : vector<1x128xf32> to vector<16x128xf32>
    %15 = arith.addf %13, %14 : vector<16x128xf32>
    %cst_15 = arith.constant 0.000000e+00 : f32
    %16 = vector.broadcast %cst_15 : f32 to vector<16x128xf32>
    %17 = arith.maximumf %15, %16 : vector<16x128xf32>
    %18 = arith.truncf %17 : vector<16x128xf32> to vector<16x128xbf16>
    %cst_16 = arith.constant dense<0.000000e+00> : vector<16x128xf32>
    %19 = tpu.matmul %18, %3, %cst_16 {dimension_numbers = #tpu.dot_dimension_numbers<[1], [0], [0], [1], [0, 0, 1, 1], [], []>} : vector<16x128xbf16>, vector<128x128xbf16>, vector<16x128xf32> -> vector<16x128xf32>
    %20 = vector.broadcast %4 : vector<1x128xf32> to vector<16x128xf32>
    %21 = arith.addf %19, %20 : vector<16x128xf32>
    %cst_17 = arith.constant 0.000000e+00 : f32
    %22 = vector.broadcast %cst_17 : f32 to vector<16x128xf32>
    %23 = arith.maximumf %21, %22 : vector<16x128xf32>
    %24 = arith.truncf %23 : vector<16x128xf32> to vector<16x128xbf16>
    %cst_18 = arith.constant dense<0.000000e+00> : vector<16x128xf32>
    %25 = tpu.matmul %24, %5, %cst_18 {dimension_numbers = #tpu.dot_dimension_numbers<[1], [0], [0], [1], [0, 0, 1, 1], [], []>} : vector<16x128xbf16>, vector<128x128xbf16>, vector<16x128xf32> -> vector<16x128xf32>
    %26 = vector.broadcast %6 : vector<1x128xf32> to vector<16x128xf32>
    %27 = arith.addf %25, %26 : vector<16x128xf32>
    %cst_19 = arith.constant 0.000000e+00 : f32
    %28 = vector.broadcast %cst_19 : f32 to vector<16x128xf32>
    %29 = arith.maximumf %27, %28 : vector<16x128xf32>
    %c0_20 = arith.constant 0 : index
    %c0_21 = arith.constant 0 : index
    %30 = vector.load %arg8[%c0_20, %c0_21] : memref<16x128xf32, #tpu.memory_space<vmem>>, vector<16x128xf32>
    tpu.vector_store %arg8[%c0_20, %c0_21], %29 {strides = array<i32>} : memref<16x128xf32, #tpu.memory_space<vmem>>, vector<16x128xf32>,
    return
  }
  func.func @transform_0(%arg0: i32) -> (i32, i32) {
    %c0_i32 = arith.constant 0 : i32
    %c0_i32_0 = arith.constant 0 : i32
    return %arg0, %c0_i32 : i32, i32
  }
  func.func @transform_1(%arg0: i32) -> (i32, i32) {
    %c0_i32 = arith.constant 0 : i32
    %c0_i32_0 = arith.constant 0 : i32
    %c0_i32_1 = arith.constant 0 : i32
    return %c0_i32, %c0_i32_0 : i32, i32
  }
  func.func @transform_2(%arg0: i32) -> (i32, i32) {
    %c0_i32 = arith.constant 0 : i32
    %c0_i32_0 = arith.constant 0 : i32
    %c0_i32_1 = arith.constant 0 : i32
    return %c0_i32, %c0_i32_0 : i32, i32
  }
  func.func @transform_3(%arg0: i32) -> (i32, i32) {
    %c0_i32 = arith.constant 0 : i32
    %c0_i32_0 = arith.constant 0 : i32
    %c0_i32_1 = arith.constant 0 : i32
    return %c0_i32, %c0_i32_0 : i32, i32
  }
  func.func @transform_4(%arg0: i32) -> (i32, i32) {
    %c0_i32 = arith.constant 0 : i32
    %c0_i32_0 = arith.constant 0 : i32
    %c0_i32_1 = arith.constant 0 : i32
    return %c0_i32, %c0_i32_0 : i32, i32
  }
  func.func @transform_5(%arg0: i32) -> (i32, i32) {
    %c0_i32 = arith.constant 0 : i32
    %c0_i32_0 = arith.constant 0 : i32
    %c0_i32_1 = arith.constant 0 : i32
    return %c0_i32, %c0_i32_0 : i32, i32
  }
  func.func @transform_6(%arg0: i32) -> (i32, i32) {
    %c0_i32 = arith.constant 0 : i32
    %c0_i32_0 = arith.constant 0 : i32
    %c0_i32_1 = arith.constant 0 : i32
    return %c0_i32, %c0_i32_0 : i32, i32
  }
  func.func @transform_7(%arg0: i32) -> (i32, i32) {
    %c0_i32 = arith.constant 0 : i32
    %c0_i32_0 = arith.constant 0 : i32
    return %arg0, %c0_i32 : i32, i32
  }
}

</mosaic_0001>

<llo_original>
// kernel: _lambda_.1
$region0: #{_lambda_.1}
  #allocation0 [shape = 'u32[]', space=smem, size = 0x4, offset = 0x4, fixed_abs, tag = 'smem constant byte address 0x4 - core index']
  #allocation1 [shape = 'u32[144,128]{1,0:T(1,128)}', space=vmem, size = 0x12000, scoped, tag = 'internal scratch']
  %s0 = inlined_call_operand.vmem [shape: bf16[16,128], index: 0, kind: input, shape index: {}]
  %s1 = inlined_call_operand.hbm [shape: bf16[128,128], index: 1, kind: input, shape index: {}]
  %s2 = inlined_call_operand.vmem [shape: f32[1,128], index: 2, kind: input, shape index: {}]
  %s3 = inlined_call_operand.hbm [shape: bf16[128,128], index: 3, kind: input, shape index: {}]
  %s4 = inlined_call_operand.vmem [shape: f32[1,128], index: 4, kind: input, shape index: {}]
  %s5 = inlined_call_operand.hbm [shape: bf16[128,128], index: 5, kind: input, shape index: {}]
  %s6 = inlined_call_operand.vmem [shape: f32[1,128], index: 6, kind: input, shape index: {}]
  %s7 = inlined_call_operand.vmem [shape: f32[16,128], index: 7, kind: output, shape index: {}]
  %s8 = sld [smem:[#allocation0]]
  $region50: #{_lambda_.1} parent=0
    _
  %s10 = ssub.s32 1, %s8
  %s11 = scalar_select 0, %s10, %s8
  $region1: #{_lambda_.1} parent=0
    #allocation2 [shape = 'u8[32768]{0}', space=vmem, size = 0x8000, scoped, tag = 'input window, operand 1, single buffered']
    #allocation3 [shape = 's32[1]{0}', space=sflag, size = 0x4, scoped, tag = 'scoped memory for _lambda_.1']
    #allocation4 [shape = 'u8[32768]{0}', space=vmem, size = 0x8000, scoped, tag = 'input window, operand 3, single buffered']
    #allocation5 [shape = 's32[1]{0}', space=sflag, size = 0x4, scoped, tag = 'scoped memory for _lambda_.1']
    #allocation6 [shape = 'u8[32768]{0}', space=vmem, size = 0x8000, scoped, tag = 'input window, operand 5, single buffered']
    %12 = vsyncpa [#allocation3], 0
    %13 = vsyncpa [#allocation5], 0
    // Predicated region
    $region2: #{_lambda_.1} parent=1 // pred_check
      _
    $region3: #{_lambda_.1} parent=1 // pred_check_branch
      %15 = sbr.rel (0) target = $region5
    $region4: #{_lambda_.1} parent=1 // pred_region
      _
    $region5: #{_lambda_.1} parent=1 // pred_fallthru
      _
    // Predicated region
    $region6: #{_lambda_.1} parent=1 // pred_check
      _
    $region7: #{_lambda_.1} parent=1 // pred_check_branch
      %17 = sbr.rel (0) target = $region9
    $region8: #{_lambda_.1} parent=1 // pred_region
      %s19 = ssub.s32 1024, 1024
      %20 = vsyncadd [#allocation3], %s19
      %s21 = sshll.u32 [#allocation2], 4
      %s22 = int_to_ptr.vmem [resolvable:$true] %s21
      %27 = dma.hbm_to_vmem [thread:$0]  %s1, 1024, %s22, [#allocation3], 64, 64, 4
    $region9: #{_lambda_.1} parent=1 // pred_fallthru
      _
    // Predicated region
    $region10: #{_lambda_.1} parent=1 // pred_check
      _
    $region11: #{_lambda_.1} parent=1 // pred_check_branch
      %29 = sbr.rel (0) target = $region13
    $region12: #{_lambda_.1} parent=1 // pred_region
      _
    $region13: #{_lambda_.1} parent=1 // pred_fallthru
      _
    // Predicated region
    $region14: #{_lambda_.1} parent=1 // pred_check
      _
    $region15: #{_lambda_.1} parent=1 // pred_check_branch
      %31 = sbr.rel (0) target = $region17
    $region16: #{_lambda_.1} parent=1 // pred_region
      %s33 = ssub.s32 1024, 1024
      %34 = vsyncadd [#allocation5], %s33
      %s35 = sshll.u32 [#allocation4], 4
      %s36 = int_to_ptr.vmem [resolvable:$true] %s35
      %41 = dma.hbm_to_vmem [thread:$0]  %s3, 1024, %s36, [#allocation5], 64, 64, 4
    $region17: #{_lambda_.1} parent=1 // pred_fallthru
      _
    // Predicated region
    $region18: #{_lambda_.1} parent=1 // pred_check
      _
    $region19: #{_lambda_.1} parent=1 // pred_check_branch
      %43 = sbr.rel (0) target = $region21
    $region20: #{_lambda_.1} parent=1 // pred_region
      _
    $region21: #{_lambda_.1} parent=1 // pred_fallthru
      _
    // Predicated region
    $region22: #{_lambda_.1} parent=1 // pred_check
      _
    $region23: #{_lambda_.1} parent=1 // pred_check_branch
      %45 = sbr.rel (0) target = $region25
    $region24: #{_lambda_.1} parent=1 // pred_region
      %s47 = ssub.s32 1024, 1024
      %48 = vsyncadd [#allocation5], %s47
      %s49 = sshll.u32 [#allocation6], 4
      %s50 = int_to_ptr.vmem [resolvable:$true] %s49
      %55 = dma.hbm_to_vmem [thread:$0]  %s5, 1024, %s50, [#allocation5], 64, 64, 4
    $region25: #{_lambda_.1} parent=1 // pred_fallthru
      _
    // Predicated region
    $region26: #{_lambda_.1} parent=1 // pred_check
      _
    $region27: #{_lambda_.1} parent=1 // pred_check_branch
      %57 = sbr.rel (0) target = $region29
    $region28: #{_lambda_.1} parent=1 // pred_region
      _
    $region29: #{_lambda_.1} parent=1 // pred_fallthru
      _
    // Predicated region
    $region30: #{_lambda_.1} parent=1 // pred_check
      _
    $region31: #{_lambda_.1} parent=1 // pred_check_branch
      %59 = sbr.rel (0) target = $region33
    $region32: #{_lambda_.1} parent=1 // pred_region
      %60 = dma.done [#allocation3], 1024
    $region33: #{_lambda_.1} parent=1 // pred_fallthru
      _
    // Predicated region
    $region34: #{_lambda_.1} parent=1 // pred_check
      _
    $region35: #{_lambda_.1} parent=1 // pred_check_branch
      %62 = sbr.rel (0) target = $region37
    $region36: #{_lambda_.1} parent=1 // pred_region
      %63 = dma.done [#allocation5], 1024
    $region37: #{_lambda_.1} parent=1 // pred_fallthru
      _
    // Predicated region
    $region38: #{_lambda_.1} parent=1 // pred_check
      _
    $region39: #{_lambda_.1} parent=1 // pred_check_branch
      %65 = sbr.rel (0) target = $region41
    $region40: #{_lambda_.1} parent=1 // pred_region
      %66 = dma.done [#allocation5], 1024
    $region41: #{_lambda_.1} parent=1 // pred_fallthru
      _
    %v68 = vld [vmem:[%s0] sm:$0xf]
    %v69 = vld [vmem:[%s0 + $0x4] sm:$0xf]
    %v70 = vld [vmem:[#allocation2] sm:$0xf]
    %v71 = vld [vmem:[#allocation2 + $0x4] sm:$0xf]
    %v72 = vld [vmem:[#allocation2 + $0x8] sm:$0xf]
    %v73 = vld [vmem:[#allocation2 + $0xc] sm:$0xf]
    %v74 = vld [vmem:[#allocation2 + $0x10] sm:$0xf]
    %v75 = vld [vmem:[#allocation2 + $0x14] sm:$0xf]
    %v76 = vld [vmem:[#allocation2 + $0x18] sm:$0xf]
    %v77 = vld [vmem:[#allocation2 + $0x1c] sm:$0xf]
    %v78 = vld [vmem:[#allocation2 + $0x20] sm:$0xf]
    %v79 = vld [vmem:[#allocation2 + $0x24] sm:$0xf]
    %v80 = vld [vmem:[#allocation2 + $0x28] sm:$0xf]
    %v81 = vld [vmem:[#allocation2 + $0x2c] sm:$0xf]
    %v82 = vld [vmem:[#allocation2 + $0x30] sm:$0xf]
    %v83 = vld [vmem:[#allocation2 + $0x34] sm:$0xf]
    %v84 = vld [vmem:[#allocation2 + $0x38] sm:$0xf]
    %v85 = vld [vmem:[#allocation2 + $0x3c] sm:$0xf]
    %v86 = vld [vmem:[%s2] sm:$0x1]
    %v87 = vld [vmem:[#allocation4] sm:$0xf]
    %v88 = vld [vmem:[#allocation4 + $0x4] sm:$0xf]
    %v89 = vld [vmem:[#allocation4 + $0x8] sm:$0xf]
    %v90 = vld [vmem:[#allocation4 + $0xc] sm:$0xf]
    %v91 = vld [vmem:[#allocation4 + $0x10] sm:$0xf]
    %v92 = vld [vmem:[#allocation4 + $0x14] sm:$0xf]
    %v93 = vld [vmem:[#allocation4 + $0x18] sm:$0xf]
    %v94 = vld [vmem:[#allocation4 + $0x1c] sm:$0xf]
    %v95 = vld [vmem:[#allocation4 + $0x20] sm:$0xf]
    %v96 = vld [vmem:[#allocation4 + $0x24] sm:$0xf]
    %v97 = vld [vmem:[#allocation4 + $0x28] sm:$0xf]
    %v98 = vld [vmem:[#allocation4 + $0x2c] sm:$0xf]
    %v99 = vld [vmem:[#allocation4 + $0x30] sm:$0xf]
    %v100 = vld [vmem:[#allocation4 + $0x34] sm:$0xf]
    %v101 = vld [vmem:[#allocation4 + $0x38] sm:$0xf]
    %v102 = vld [vmem:[#allocation4 + $0x3c] sm:$0xf]
    %v103 = vld [vmem:[%s4] sm:$0x1]
    %v104 = vld [vmem:[#allocation6] sm:$0xf]
    %v105 = vld [vmem:[#allocation6 + $0x4] sm:$0xf]
    %v106 = vld [vmem:[#allocation6 + $0x8] sm:$0xf]
    %v107 = vld [vmem:[#allocation6 + $0xc] sm:$0xf]
    %v108 = vld [vmem:[#allocation6 + $0x10] sm:$0xf]
    %v109 = vld [vmem:[#allocation6 + $0x14] sm:$0xf]
    %v110 = vld [vmem:[#allocation6 + $0x18] sm:$0xf]
    %v111 = vld [vmem:[#allocation6 + $0x1c] sm:$0xf]
    %v112 = vld [vmem:[#allocation6 + $0x20] sm:$0xf]
    %v113 = vld [vmem:[#allocation6 + $0x24] sm:$0xf]
    %v114 = vld [vmem:[#allocation6 + $0x28] sm:$0xf]
    %v115 = vld [vmem:[#allocation6 + $0x2c] sm:$0xf]
    %v116 = vld [vmem:[#allocation6 + $0x30] sm:$0xf]
    %v117 = vld [vmem:[#allocation6 + $0x34] sm:$0xf]
    %v118 = vld [vmem:[#allocation6 + $0x38] sm:$0xf]
    %v119 = vld [vmem:[#allocation6 + $0x3c] sm:$0xf]
    %v120 = vld [vmem:[%s6] sm:$0x1]
    %v122 = vlaneseq
    %v123 = vshrl.u32 %v122, 7
    %v124 = vsub.s32 0, %v123
    %v125 = vrot.slane %v86, %v124
    %v129 = vunpack.c.l.b16 %v68
    %v130 = vunpack.c.l.b16 %v69
    %v131 = vpack.c.b16 %v130, %v129
    %v149 = vunpack.c.l.b16 %v70
    %v150 = vunpack.c.l.b16 %v71
    %v151 = vunpack.c.l.b16 %v72
    %v152 = vunpack.c.l.b16 %v73
    %v153 = vunpack.c.l.b16 %v74
    %v154 = vunpack.c.l.b16 %v75
    %v155 = vunpack.c.l.b16 %v76
    %v156 = vunpack.c.l.b16 %v77
    %v157 = vunpack.c.l.b16 %v78
    %v158 = vunpack.c.l.b16 %v79
    %v159 = vunpack.c.l.b16 %v80
    %v160 = vunpack.c.l.b16 %v81
    %v161 = vunpack.c.l.b16 %v82
    %v162 = vunpack.c.l.b16 %v83
    %v163 = vunpack.c.l.b16 %v84
    %v164 = vunpack.c.l.b16 %v85
    %v165 = vpack.c.b16 %v150, %v149
    %v166 = vpack.c.b16 %v152, %v151
    %v167 = vpack.c.b16 %v154, %v153
    %v168 = vpack.c.b16 %v156, %v155
    %v169 = vpack.c.b16 %v158, %v157
    %v170 = vpack.c.b16 %v160, %v159
    %v171 = vpack.c.b16 %v162, %v161
    %v172 = vpack.c.b16 %v164, %v163
    %181 = vmatprep.subr.bf16.mxu0 0
    %182 = vmatpush1.bf16.msra.mxu0 %v165
    %183 = vmatprep.subr.bf16.mxu0 0
    %184 = vmatpush1.bf16.msra.mxu0 %v166
    %185 = vmatprep.subr.bf16.mxu0 0
    %186 = vmatpush1.bf16.msra.mxu0 %v167
    %187 = vmatprep.subr.bf16.mxu0 0
    %188 = vmatpush1.bf16.msra.mxu0 %v168
    %189 = vmatprep.subr.bf16.mxu0 0
    %190 = vmatpush1.bf16.msra.mxu0 %v169
    %191 = vmatprep.subr.bf16.mxu0 0
    %192 = vmatpush1.bf16.msra.mxu0 %v170
    %193 = vmatprep.subr.bf16.mxu0 0
    %194 = vmatpush1.bf16.msra.mxu0 %v171
    %195 = vmatprep.subr.bf16.mxu0 0
    %196 = vmatpush1.bf16.msra.mxu0 %v172
    %197 = vmatprep.subr.bf16.mxu0 0
    %198 = vmatpush1.bf16.msra.mxu0 0
    %199 = vmatprep.subr.bf16.mxu0 0
    %200 = vmatpush1.bf16.msra.mxu0 0
    %201 = vmatprep.subr.bf16.mxu0 0
    %202 = vmatpush1.bf16.msra.mxu0 0
    %203 = vmatprep.subr.bf16.mxu0 0
    %204 = vmatpush1.bf16.msra.mxu0 0
    %205 = vmatprep.subr.bf16.mxu0 0
    %206 = vmatpush1.bf16.msra.mxu0 0
    %207 = vmatprep.subr.bf16.mxu0 0
    %208 = vmatpush1.bf16.msra.mxu0 0
    %209 = vmatprep.subr.bf16.mxu0 0
    %210 = vmatpush1.bf16.msra.mxu0 0
    %211 = vmatprep.subr.bf16.mxu0 0
    %212 = vmatpush1.bf16.msra.mxu0 0
    %213 = vmatprep.mubr.bf16.mxu0 0
    %214 = vmatmul.mubr.bf16.gmra.mrb[0].mxu0 %v131
    %v215 = vpop.f32.mrb[0].mxu0
    %v216 = vadd.f32 %v125, %v215
    %v217 = vpop.f32.mrb[0].mxu0
    %v218 = vpop.f32.mrb[0].mxu0
    %v219 = vadd.f32 %v125, %v218
    %v220 = vpop.f32.mrb[0].mxu0
    %221 = vdwg.mxu0
    %v222 = vmax.f32 %v216, 0.0
    %v223 = vmax.f32 %v219, 0.0
    %v224 = vpack.c.bf16 %v223, %v222
    %v226 = vlaneseq
    %v227 = vshrl.u32 %v226, 7
    %v228 = vsub.s32 0, %v227
    %v229 = vrot.slane %v103, %v228
    %v247 = vunpack.c.l.b16 %v87
    %v248 = vunpack.c.l.b16 %v88
    %v249 = vunpack.c.l.b16 %v89
    %v250 = vunpack.c.l.b16 %v90
    %v251 = vunpack.c.l.b16 %v91
    %v252 = vunpack.c.l.b16 %v92
    %v253 = vunpack.c.l.b16 %v93
    %v254 = vunpack.c.l.b16 %v94
    %v255 = vunpack.c.l.b16 %v95
    %v256 = vunpack.c.l.b16 %v96
    %v257 = vunpack.c.l.b16 %v97
    %v258 = vunpack.c.l.b16 %v98
    %v259 = vunpack.c.l.b16 %v99
    %v260 = vunpack.c.l.b16 %v100
    %v261 = vunpack.c.l.b16 %v101
    %v262 = vunpack.c.l.b16 %v102
    %v263 = vpack.c.b16 %v248, %v247
    %v264 = vpack.c.b16 %v250, %v249
    %v265 = vpack.c.b16 %v252, %v251
    %v266 = vpack.c.b16 %v254, %v253
    %v267 = vpack.c.b16 %v256, %v255
    %v268 = vpack.c.b16 %v258, %v257
    %v269 = vpack.c.b16 %v260, %v259
    %v270 = vpack.c.b16 %v262, %v261
    %279 = vmatprep.subr.bf16.mxu0 0
    %280 = vmatpush1.bf16.msra.mxu0 %v263
    %281 = vmatprep.subr.bf16.mxu0 0
    %282 = vmatpush1.bf16.msra.mxu0 %v264
    %283 = vmatprep.subr.bf16.mxu0 0
    %284 = vmatpush1.bf16.msra.mxu0 %v265
    %285 = vmatprep.subr.bf16.mxu0 0
    %286 = vmatpush1.bf16.msra.mxu0 %v266
    %287 = vmatprep.subr.bf16.mxu0 0
    %288 = vmatpush1.bf16.msra.mxu0 %v267
    %289 = vmatprep.subr.bf16.mxu0 0
    %290 = vmatpush1.bf16.msra.mxu0 %v268
    %291 = vmatprep.subr.bf16.mxu0 0
    %292 = vmatpush1.bf16.msra.mxu0 %v269
    %293 = vmatprep.subr.bf16.mxu0 0
    %294 = vmatpush1.bf16.msra.mxu0 %v270
    %295 = vmatprep.subr.bf16.mxu0 0
    %296 = vmatpush1.bf16.msra.mxu0 0
    %297 = vmatprep.subr.bf16.mxu0 0
    %298 = vmatpush1.bf16.msra.mxu0 0
    %299 = vmatprep.subr.bf16.mxu0 0
    %300 = vmatpush1.bf16.msra.mxu0 0
    %301 = vmatprep.subr.bf16.mxu0 0
    %302 = vmatpush1.bf16.msra.mxu0 0
    %303 = vmatprep.subr.bf16.mxu0 0
    %304 = vmatpush1.bf16.msra.mxu0 0
    %305 = vmatprep.subr.bf16.mxu0 0
    %306 = vmatpush1.bf16.msra.mxu0 0
    %307 = vmatprep.subr.bf16.mxu0 0
    %308 = vmatpush1.bf16.msra.mxu0 0
    %309 = vmatprep.subr.bf16.mxu0 0
    %310 = vmatpush1.bf16.msra.mxu0 0
    %311 = vmatprep.mubr.bf16.mxu0 0
    %312 = vmatmul.mubr.bf16.gmra.mrb[0].mxu0 %v224
    %v313 = vpop.f32.mrb[0].mxu0
    %v314 = vadd.f32 %v229, %v313
    %v315 = vpop.f32.mrb[0].mxu0
    %v316 = vpop.f32.mrb[0].mxu0
    %v317 = vadd.f32 %v229, %v316
    %v318 = vpop.f32.mrb[0].mxu0
    %319 = vdwg.mxu0
    %v320 = vmax.f32 %v314, 0.0
    %v321 = vmax.f32 %v317, 0.0
    %v322 = vpack.c.bf16 %v321, %v320
    %323 = vmatprep.subr.bf16.mxu0 0
    %324 = vmatpush1.bf16.msra.mxu0 %v263
    %325 = vmatprep.subr.bf16.mxu0 0
    %326 = vmatpush1.bf16.msra.mxu0 %v264
    %327 = vmatprep.subr.bf16.mxu0 0
    %328 = vmatpush1.bf16.msra.mxu0 %v265
    %329 = vmatprep.subr.bf16.mxu0 0
    %330 = vmatpush1.bf16.msra.mxu0 %v266
    %331 = vmatprep.subr.bf16.mxu0 0
    %332 = vmatpush1.bf16.msra.mxu0 %v267
    %333 = vmatprep.subr.bf16.mxu0 0
    %334 = vmatpush1.bf16.msra.mxu0 %v268
    %335 = vmatprep.subr.bf16.mxu0 0
    %336 = vmatpush1.bf16.msra.mxu0 %v269
    %337 = vmatprep.subr.bf16.mxu0 0
    %338 = vmatpush1.bf16.msra.mxu0 %v270
    %339 = vmatprep.subr.bf16.mxu0 0
    %340 = vmatpush1.bf16.msra.mxu0 0
    %341 = vmatprep.subr.bf16.mxu0 0
    %342 = vmatpush1.bf16.msra.mxu0 0
    %343 = vmatprep.subr.bf16.mxu0 0
    %344 = vmatpush1.bf16.msra.mxu0 0
    %345 = vmatprep.subr.bf16.mxu0 0
    %346 = vmatpush1.bf16.msra.mxu0 0
    %347 = vmatprep.subr.bf16.mxu0 0
    %348 = vmatpush1.bf16.msra.mxu0 0
    %349 = vmatprep.subr.bf16.mxu0 0
    %350 = vmatpush1.bf16.msra.mxu0 0
    %351 = vmatprep.subr.bf16.mxu0 0
    %352 = vmatpush1.bf16.msra.mxu0 0
    %353 = vmatprep.subr.bf16.mxu0 0
    %354 = vmatpush1.bf16.msra.mxu0 0
    %355 = vmatprep.mubr.bf16.mxu0 0
    %356 = vmatmul.mubr.bf16.gmra.mrb[0].mxu0 %v322
    %v357 = vpop.f32.mrb[0].mxu0
    %v358 = vadd.f32 %v229, %v357
    %v359 = vpop.f32.mrb[0].mxu0
    %v360 = vpop.f32.mrb[0].mxu0
    %v361 = vadd.f32 %v229, %v360
    %v362 = vpop.f32.mrb[0].mxu0
    %363 = vdwg.mxu0
    %v364 = vmax.f32 %v358, 0.0
    %v365 = vmax.f32 %v361, 0.0
    %v366 = vpack.c.bf16 %v365, %v364
    %v368 = vlaneseq
    %v369 = vshrl.u32 %v368, 7
    %v370 = vsub.s32 0, %v369
    %v371 = vrot.slane %v120, %v370
    %v389 = vunpack.c.l.b16 %v104
    %v390 = vunpack.c.l.b16 %v105
    %v391 = vunpack.c.l.b16 %v106
    %v392 = vunpack.c.l.b16 %v107
    %v393 = vunpack.c.l.b16 %v108
    %v394 = vunpack.c.l.b16 %v109
    %v395 = vunpack.c.l.b16 %v110
    %v396 = vunpack.c.l.b16 %v111
    %v397 = vunpack.c.l.b16 %v112
    %v398 = vunpack.c.l.b16 %v113
    %v399 = vunpack.c.l.b16 %v114
    %v400 = vunpack.c.l.b16 %v115
    %v401 = vunpack.c.l.b16 %v116
    %v402 = vunpack.c.l.b16 %v117
    %v403 = vunpack.c.l.b16 %v118
    %v404 = vunpack.c.l.b16 %v119
    %v405 = vpack.c.b16 %v390, %v389
    %v406 = vpack.c.b16 %v392, %v391
    %v407 = vpack.c.b16 %v394, %v393
    %v408 = vpack.c.b16 %v396, %v395
    %v409 = vpack.c.b16 %v398, %v397
    %v410 = vpack.c.b16 %v400, %v399
    %v411 = vpack.c.b16 %v402, %v401
    %v412 = vpack.c.b16 %v404, %v403
    %421 = vmatprep.subr.bf16.mxu0 0
    %422 = vmatpush1.bf16.msra.mxu0 %v405
    %423 = vmatprep.subr.bf16.mxu0 0
    %424 = vmatpush1.bf16.msra.mxu0 %v406
    %425 = vmatprep.subr.bf16.mxu0 0
    %426 = vmatpush1.bf16.msra.mxu0 %v407
    %427 = vmatprep.subr.bf16.mxu0 0
    %428 = vmatpush1.bf16.msra.mxu0 %v408
    %429 = vmatprep.subr.bf16.mxu0 0
    %430 = vmatpush1.bf16.msra.mxu0 %v409
    %431 = vmatprep.subr.bf16.mxu0 0
    %432 = vmatpush1.bf16.msra.mxu0 %v410
    %433 = vmatprep.subr.bf16.mxu0 0
    %434 = vmatpush1.bf16.msra.mxu0 %v411
    %435 = vmatprep.subr.bf16.mxu0 0
    %436 = vmatpush1.bf16.msra.mxu0 %v412
    %437 = vmatprep.subr.bf16.mxu0 0
    %438 = vmatpush1.bf16.msra.mxu0 0
    %439 = vmatprep.subr.bf16.mxu0 0
    %440 = vmatpush1.bf16.msra.mxu0 0
    %441 = vmatprep.subr.bf16.mxu0 0
    %442 = vmatpush1.bf16.msra.mxu0 0
    %443 = vmatprep.subr.bf16.mxu0 0
    %444 = vmatpush1.bf16.msra.mxu0 0
    %445 = vmatprep.subr.bf16.mxu0 0
    %446 = vmatpush1.bf16.msra.mxu0 0
    %447 = vmatprep.subr.bf16.mxu0 0
    %448 = vmatpush1.bf16.msra.mxu0 0
    %449 = vmatprep.subr.bf16.mxu0 0
    %450 = vmatpush1.bf16.msra.mxu0 0
    %451 = vmatprep.subr.bf16.mxu0 0
    %452 = vmatpush1.bf16.msra.mxu0 0
    %453 = vmatprep.mubr.bf16.mxu0 0
    %454 = vmatmul.mubr.bf16.gmra.mrb[0].mxu0 %v366
    %v455 = vpop.f32.mrb[0].mxu0
    %v456 = vadd.f32 %v371, %v455
    %v457 = vpop.f32.mrb[0].mxu0
    %v458 = vpop.f32.mrb[0].mxu0
    %v459 = vadd.f32 %v371, %v458
    %v460 = vpop.f32.mrb[0].mxu0
    %461 = vdwg.mxu0
    %v462 = vmax.f32 %v456, 0.0
    %v463 = vmax.f32 %v459, 0.0
    %464 = vst [vmem:[%s7] sm:$0xff] %v462
    %465 = vst [vmem:[%s7 + $0x8] sm:$0xff] %v463
    // Predicated region
    $region42: #{_lambda_.1} parent=1 // pred_check
      _
    $region43: #{_lambda_.1} parent=1 // pred_check_branch
      %467 = sbr.rel (0) target = $region45
    $region44: #{_lambda_.1} parent=1 // pred_region
      _
    $region45: #{_lambda_.1} parent=1 // pred_fallthru
      _
    // Predicated region
    $region46: #{_lambda_.1} parent=1 // pred_check
      _
    $region47: #{_lambda_.1} parent=1 // pred_check_branch
      %469 = sbr.rel (0) target = $region49
    $region48: #{_lambda_.1} parent=1 // pred_region
      _
    $region49: #{_lambda_.1} parent=1 // pred_fallthru
      _
    %470 = vsyncpa [#allocation3], 1
    %471 = vsyncpa [#allocation5], 1

</llo_original>
